<compile_context>
chip_gen: v7x
topology: tpu7x:2x2x1
jax: 0.10.0
libtpu: 0.0.40
codegen_flags: <defaults>
</compile_context>

<pallas_src>
import jax
import jax.numpy as jnp
from jax import lax
from jax.experimental import pallas as pl
from jax.experimental.pallas import tpu as pltpu

INPUT_DIM = 12
OUTPUT_DIM = 1
HIDDEN_DIMS = (48, 48, 24, 24, 24)   # matches nn.Sequential in the module


def _mlp_softmax_kernel(x_ref,
                        w1_ref, b1_ref,
                        w2_ref, b2_ref,
                        w3_ref, b3_ref,
                        w4_ref, b4_ref,
                        w5_ref, b5_ref,
                        w6_ref, b6_ref,
                        o_ref):
    """Full forward pass for one (batch_tile, INPUT_DIM) input tile."""
    mxu_dtype = w1_ref.dtype                      # bf16 (pre-cast in wrapper)

    # ---- layer 1: fold the (bt, in) -> (in, bt) flip into the matmul ------
    x = x_ref[...].astype(mxu_dtype)              # (bt, in)
    acc = lax.dot_general(w1_ref[...], x,
                          dimension_numbers=(((1,), (1,)), ((), ())),
                          preferred_element_type=jnp.float32)   # (48, bt) f32
    h = jnp.maximum(acc.astype(b1_ref.dtype) + b1_ref[...], 0.0).astype(mxu_dtype)

    # ---- hidden layers 2..5 ------------------------------------------------
    def hidden(h, w_ref, b_ref):
        acc = jnp.dot(w_ref[...], h, preferred_element_type=jnp.float32)
        z = acc.astype(b_ref.dtype) + b_ref[...]   # bias+ReLU in VPU dtype
        return jnp.maximum(z, 0.0).astype(mxu_dtype)

    h = hidden(h, w2_ref, b2_ref)
    h = hidden(h, w3_ref, b3_ref)
    h = hidden(h, w4_ref, b4_ref)
    h = hidden(h, w5_ref, b5_ref)

    # ---- output layer + softmax over features (axis 0), in f32 -------------
    logits = jnp.dot(w6_ref[...], h, preferred_element_type=jnp.float32) + b6_ref[...]

    if logits.shape[0] == 1:
        # Softmax over a single logit is identically 1.0 (trace-time fold).
        probs = jnp.ones_like(logits)
    else:
        m = jnp.max(logits, axis=0, keepdims=True)
        e = jnp.exp(logits - m)
        probs = e / jnp.sum(e, axis=0, keepdims=True)

    o_ref[...] = probs.astype(o_ref.dtype)        # lane-dense (OUTPUT_DIM, bt) store


def _elementwise_dtype():
    """bf16 bias/ReLU only on chips with a native bf16 VPU (v6e / v7x)."""
    try:
        kind = jax.devices()[0].device_kind.lower()
    except Exception:
        return jnp.float32
    return jnp.bfloat16 if any(t in kind for t in ("v6", "v7", "6e", "7x")) else jnp.float32


def forcast_model_multi_forward(x, params, *, batch_tile=2048):
    """Pallas forward pass.

    x: (B, INPUT_DIM) float32 in native PyTorch layout. Returns (B, OUTPUT_DIM).
    params: list of (w, b) with w (out, in) f32 and b (out, 1) f32.
    """
    B, F = x.shape
    assert F == INPUT_DIM

    # Lane-aligned tile; clamp so the grid keeps >= ~4 steps when B allows it
    # (so "parallel" can shard across both v7x TensorCores).
    batch_tile = max(128, (batch_tile // 128) * 128)
    batch_tile = min(batch_tile, max(128, (B // 4 // 128) * 128))
    n_tiles = pl.cdiv(B, batch_tile)

    ew_dtype = _elementwise_dtype()
    n_layers = len(params)

    # Pre-cast parameters once: weights -> bf16 MXU operands; hidden biases ->
    # element-wise dtype; final bias stays f32 (feeds the f32 softmax logits).
    flat_params = []
    in_specs = [pl.BlockSpec((batch_tile, INPUT_DIM), lambda i: (i, 0))]
    for li, (w, b) in enumerate(params):
        w = w.astype(jnp.bfloat16)
        b = b.astype(jnp.float32 if li == n_layers - 1 else ew_dtype)
        in_specs.append(pl.BlockSpec(w.shape, lambda i: (0, 0)))
        in_specs.append(pl.BlockSpec(b.shape, lambda i: (0, 0)))
        flat_params.extend((w, b))

    out_spec = pl.BlockSpec((OUTPUT_DIM, batch_tile), lambda i: (0, i))

    fn = pl.pallas_call(
        _mlp_softmax_kernel,
        grid=(n_tiles,),
        in_specs=in_specs,
        out_specs=out_spec,
        out_shape=jax.ShapeDtypeStruct((OUTPUT_DIM, B), jnp.float32),
        compiler_params=pltpu.CompilerParams(
            dimension_semantics=("parallel",)),   # shards tiles across v7x TCs
    )
    out_t = fn(x, *flat_params)
    # (OUTPUT_DIM, B) and (B, OUTPUT_DIM) share the same contiguous layout for
    # OUTPUT_DIM == 1, so this final transpose is effectively free.
    return out_t.T


def init_params(key):
    """PyTorch-style Linear init U(-1/sqrt(fan_in), +1/sqrt(fan_in)).

    Weights stored as (out, in), biases as (out, 1) so the kernel computes
    W @ h directly in the (features, batch) layout.
    """
    dims = (INPUT_DIM,) + HIDDEN_DIMS + (OUTPUT_DIM,)
    params = []
    for fan_in, fan_out in zip(dims[:-1], dims[1:]):
        key, kw, kb = jax.random.split(key, 3)
        bound = 1.0 / jnp.sqrt(jnp.float32(fan_in))
        w = jax.random.uniform(kw, (fan_out, fan_in), jnp.float32, -bound, bound)
        b = jax.random.uniform(kb, (fan_out, 1), jnp.float32, -bound, bound)
        params.append((w, b))
    return params


def _reference_forward(x, params):
    """Pure-JAX reference in the PyTorch (batch, features) orientation."""
    h = x
    for i, (w, b) in enumerate(params):
        h = h @ w.T + b.T
        if i < len(params) - 1:
            h = jnp.maximum(h, 0.0)
    return jax.nn.softmax(h, axis=-1)


if __name__ == "__main__":
    key = jax.random.PRNGKey(0)
    key, kx = jax.random.split(key)

    # Small demo batch, deliberately NOT a multiple of 128 so the ragged
    # last-tile path is exercised; tile clamping yields 3 parallel grid steps.
    B = 300
    x = jax.random.normal(kx, (B, INPUT_DIM), jnp.float32)
    params = init_params(key)

    out = forcast_model_multi_forward(x, params)
    out = jax.block_until_ready(out)

    ref = _reference_forward(x, params)
    assert out.shape == (B, OUTPUT_DIM)
    assert bool(jnp.all(jnp.isfinite(out)))
    assert jnp.allclose(out, ref, atol=1e-5, rtol=1e-5)

    print("KERNEL_OK")
</pallas_src>

<mosaic_0001>
module attributes {stable_mosaic.version = 11 : i64} {
  func.func @_mlp_softmax_kernel(%arg0: i32, %arg1: memref<128x12xf32, #tpu.memory_space<vmem>>, %arg2: memref<48x12xbf16, #tpu.memory_space<vmem>>, %arg3: memref<48x1xf32, #tpu.memory_space<vmem>>, %arg4: memref<48x48xbf16, #tpu.memory_space<vmem>>, %arg5: memref<48x1xf32, #tpu.memory_space<vmem>>, %arg6: memref<24x48xbf16, #tpu.memory_space<vmem>>, %arg7: memref<24x1xf32, #tpu.memory_space<vmem>>, %arg8: memref<24x24xbf16, #tpu.memory_space<vmem>>, %arg9: memref<24x1xf32, #tpu.memory_space<vmem>>, %arg10: memref<24x24xbf16, #tpu.memory_space<vmem>>, %arg11: memref<24x1xf32, #tpu.memory_space<vmem>>, %arg12: memref<1x24xbf16, #tpu.memory_space<vmem>>, %arg13: memref<1x1xf32, #tpu.memory_space<vmem>>, %arg14: memref<1x128xf32, #tpu.memory_space<vmem>>) attributes {dimension_semantics = [#tpu.dimension_semantics<parallel>], iteration_bounds = array<i64: 3>, scalar_prefetch = 0 : i64, scratch_operands = 0 : i64, tpu.core_type = #tpu.core_type<tc>, window_params = [{transform_indices = @transform_0, window_bounds = array<i64: 128, 12>}, {pipeline_mode = #tpu.pipeline_mode<synchronous>, transform_indices = @transform_1, window_bounds = array<i64: 48, 12>}, {pipeline_mode = #tpu.pipeline_mode<synchronous>, transform_indices = @transform_2, window_bounds = array<i64: 48, 1>}, {pipeline_mode = #tpu.pipeline_mode<synchronous>, transform_indices = @transform_3, window_bounds = array<i64: 48, 48>}, {pipeline_mode = #tpu.pipeline_mode<synchronous>, transform_indices = @transform_4, window_bounds = array<i64: 48, 1>}, {pipeline_mode = #tpu.pipeline_mode<synchronous>, transform_indices = @transform_5, window_bounds = array<i64: 24, 48>}, {pipeline_mode = #tpu.pipeline_mode<synchronous>, transform_indices = @transform_6, window_bounds = array<i64: 24, 1>}, {pipeline_mode = #tpu.pipeline_mode<synchronous>, transform_indices = @transform_7, window_bounds = array<i64: 24, 24>}, {pipeline_mode = #tpu.pipeline_mode<synchronous>, transform_indices = @transform_8, window_bounds = array<i64: 24, 1>}, {pipeline_mode = #tpu.pipeline_mode<synchronous>, transform_indices = @transform_9, window_bounds = array<i64: 24, 24>}, {pipeline_mode = #tpu.pipeline_mode<synchronous>, transform_indices = @transform_10, window_bounds = array<i64: 24, 1>}, {pipeline_mode = #tpu.pipeline_mode<synchronous>, transform_indices = @transform_11, window_bounds = array<i64: 1, 24>}, {pipeline_mode = #tpu.pipeline_mode<synchronous>, transform_indices = @transform_12, window_bounds = array<i64: 1, 1>}, {transform_indices = @transform_13, window_bounds = array<i64: 1, 128>}]} {
    %cst = arith.constant 1.000000e+00 : f32
    %0 = vector.broadcast %cst : f32 to vector<1x128xf32>
    %c0 = arith.constant 0 : index
    %c0_0 = arith.constant 0 : index
    %1 = vector.load %arg14[%c0, %c0_0] : memref<1x128xf32, #tpu.memory_space<vmem>>, vector<1x128xf32>
    tpu.vector_store %arg14[%c0, %c0_0], %0 {strides = array<i32>} : memref<1x128xf32, #tpu.memory_space<vmem>>, vector<1x128xf32>,
    return
  }
  func.func @transform_0(%arg0: i32) -> (i32, i32) {
    %c0_i32 = arith.constant 0 : i32
    %c0_i32_0 = arith.constant 0 : i32
    return %arg0, %c0_i32 : i32, i32
  }
  func.func @transform_1(%arg0: i32) -> (i32, i32) {
    %c0_i32 = arith.constant 0 : i32
    %c0_i32_0 = arith.constant 0 : i32
    %c0_i32_1 = arith.constant 0 : i32
    return %c0_i32, %c0_i32_0 : i32, i32
  }
  func.func @transform_2(%arg0: i32) -> (i32, i32) {
    %c0_i32 = arith.constant 0 : i32
    %c0_i32_0 = arith.constant 0 : i32
    %c0_i32_1 = arith.constant 0 : i32
    return %c0_i32, %c0_i32_0 : i32, i32
  }
  func.func @transform_3(%arg0: i32) -> (i32, i32) {
    %c0_i32 = arith.constant 0 : i32
    %c0_i32_0 = arith.constant 0 : i32
    %c0_i32_1 = arith.constant 0 : i32
    return %c0_i32, %c0_i32_0 : i32, i32
  }
  func.func @transform_4(%arg0: i32) -> (i32, i32) {
    %c0_i32 = arith.constant 0 : i32
    %c0_i32_0 = arith.constant 0 : i32
    %c0_i32_1 = arith.constant 0 : i32
    return %c0_i32, %c0_i32_0 : i32, i32
  }
  func.func @transform_5(%arg0: i32) -> (i32, i32) {
    %c0_i32 = arith.constant 0 : i32
    %c0_i32_0 = arith.constant 0 : i32
    %c0_i32_1 = arith.constant 0 : i32
    return %c0_i32, %c0_i32_0 : i32, i32
  }
  func.func @transform_6(%arg0: i32) -> (i32, i32) {
    %c0_i32 = arith.constant 0 : i32
    %c0_i32_0 = arith.constant 0 : i32
    %c0_i32_1 = arith.constant 0 : i32
    return %c0_i32, %c0_i32_0 : i32, i32
  }
  func.func @transform_7(%arg0: i32) -> (i32, i32) {
    %c0_i32 = arith.constant 0 : i32
    %c0_i32_0 = arith.constant 0 : i32
    %c0_i32_1 = arith.constant 0 : i32
    return %c0_i32, %c0_i32_0 : i32, i32
  }
  func.func @transform_8(%arg0: i32) -> (i32, i32) {
    %c0_i32 = arith.constant 0 : i32
    %c0_i32_0 = arith.constant 0 : i32
    %c0_i32_1 = arith.constant 0 : i32
    return %c0_i32, %c0_i32_0 : i32, i32
  }
  func.func @transform_9(%arg0: i32) -> (i32, i32) {
    %c0_i32 = arith.constant 0 : i32
    %c0_i32_0 = arith.constant 0 : i32
    %c0_i32_1 = arith.constant 0 : i32
    return %c0_i32, %c0_i32_0 : i32, i32
  }
  func.func @transform_10(%arg0: i32) -> (i32, i32) {
    %c0_i32 = arith.constant 0 : i32
    %c0_i32_0 = arith.constant 0 : i32
    %c0_i32_1 = arith.constant 0 : i32
    return %c0_i32, %c0_i32_0 : i32, i32
  }
  func.func @transform_11(%arg0: i32) -> (i32, i32) {
    %c0_i32 = arith.constant 0 : i32
    %c0_i32_0 = arith.constant 0 : i32
    %c0_i32_1 = arith.constant 0 : i32
    return %c0_i32, %c0_i32_0 : i32, i32
  }
  func.func @transform_12(%arg0: i32) -> (i32, i32) {
    %c0_i32 = arith.constant 0 : i32
    %c0_i32_0 = arith.constant 0 : i32
    %c0_i32_1 = arith.constant 0 : i32
    return %c0_i32, %c0_i32_0 : i32, i32
  }
  func.func @transform_13(%arg0: i32) -> (i32, i32) {
    %c0_i32 = arith.constant 0 : i32
    %c0_i32_0 = arith.constant 0 : i32
    return %c0_i32, %arg0 : i32, i32
  }
}

</mosaic_0001>

<llo_original>
// kernel: tpu_custom_call.1
$region0: #{tpu_custom_call.1}
  #allocation0 [shape = 'u32[]', space=smem, size = 0x4, offset = 0x4, fixed_abs, tag = 'smem constant byte address 0x4 - core index']
  #allocation1 [shape = 'u32[144,128]{1,0:T(1,128)}', space=vmem, size = 0x12000, scoped, tag = 'internal scratch']
  #allocation2 [shape = 'f32[1,1]{1,0:T(1,128)S(1)}', space=vmem, size = 0x200, scoped, tag = 'scoped memory for tpu_custom_call.1']
  %s0 = inlined_call_operand.vmem [shape: f32[300,12], index: 0, kind: input, shape index: {}]
  %s1 = inlined_call_operand.vmem [shape: bf16[48,12], index: 1, kind: input, shape index: {}]
  %s2 = inlined_call_operand.vmem [shape: f32[48,1], index: 2, kind: input, shape index: {}]
  %s3 = inlined_call_operand.vmem [shape: bf16[48,48], index: 3, kind: input, shape index: {}]
  %s4 = inlined_call_operand.vmem [shape: f32[48,1], index: 4, kind: input, shape index: {}]
  %s5 = inlined_call_operand.vmem [shape: bf16[24,48], index: 5, kind: input, shape index: {}]
  %s6 = inlined_call_operand.vmem [shape: f32[24,1], index: 6, kind: input, shape index: {}]
  %s7 = inlined_call_operand.vmem [shape: bf16[24,24], index: 7, kind: input, shape index: {}]
  %s8 = inlined_call_operand.vmem [shape: f32[24,1], index: 8, kind: input, shape index: {}]
  %s9 = inlined_call_operand.vmem [shape: bf16[24,24], index: 9, kind: input, shape index: {}]
  %s10 = inlined_call_operand.vmem [shape: f32[24,1], index: 10, kind: input, shape index: {}]
  %s11 = inlined_call_operand.vmem [shape: bf16[1,24], index: 11, kind: input, shape index: {}]
  %s12 = inlined_call_operand.<no memory space> [shape: f32[1,1], index: 12, kind: input, shape index: {}]
  %s13 = inlined_call_operand.hbm [shape: f32[1,300], index: 13, kind: output, shape index: {}]
  %s14 = sld [smem:[#allocation0]]
  $region85: #{tpu_custom_call.1} parent=0
    _
  %s16 = ssub.s32 1, %s14
  %s17 = scalar_select 0, %s16, %s14
  %v18 = vstv %s12
  %19 = vst [vmem:[#allocation2] sm:$0x1] %v18
  $region1: #{tpu_custom_call.1} parent=0
    #allocation3 [shape = 'u8[1024]{0}', space=vmem, size = 0x400, scoped, tag = 'output window, operand 0']
    #allocation4 [shape = 's32[2]{0}', space=sflag, size = 0x8, scoped, tag = 'scoped memory for tpu_custom_call.1']
    %20 = vsyncpa [#allocation4], 0
    %s21 = scalar_lea.sflag [#allocation4], 1
    %22 = vsyncpa %s21, 0
    loop: start=0, step=1, limit=5
    $region2: #{tpu_custom_call.1} parent=1 // loop_pre_header
      _
    $region3: #{tpu_custom_call.1} parent=1 // loop_header
      %s24 = sphi 0, %s28
      %p25 = scmp.ge.s32.totalorder %s24, 5
      %s34 = sphi 0, %s36
      %s37 = sphi 0, %s34
      %s38 = sphi 0, %s37
      %s54 = sphi 0, %s38
      %s58 = sphi 0, %s58
      %s60 = sphi 0, %s58
      %s61 = sphi 0, %s60
      %s75 = sphi 0, %s61
      %s79 = sphi 0, %s79
      %s81 = sphi 0, %s79
      %s82 = sphi 0, %s81
      %s96 = sphi 0, %s82
      %s100 = sphi 0, %s100
      %s102 = sphi 0, %s100
      %s103 = sphi 0, %s102
      %s117 = sphi 0, %s103
      %s121 = sphi 0, %s121
      %s123 = sphi 0, %s121
      %s124 = sphi 0, %s123
      %s138 = sphi 0, %s124
      %s142 = sphi 0, %s142
      %s144 = sphi 0, %s142
      %s145 = sphi 0, %s144
      %s159 = sphi 0, %s145
      %s163 = sphi 0, %s163
      %s165 = sphi 0, %s163
      %s166 = sphi 0, %s165
      %s180 = sphi 0, %s166
      %s184 = sphi 0, %s184
      %s186 = sphi 0, %s184
      %s187 = sphi 0, %s186
      %s201 = sphi 0, %s187
      %s205 = sphi 0, %s205
      %s207 = sphi 0, %s205
      %s208 = sphi 0, %s207
      %s222 = sphi 0, %s208
      %s226 = sphi 0, %s226
      %s228 = sphi 0, %s226
      %s229 = sphi 0, %s228
      %s243 = sphi 0, %s229
      %s247 = sphi 0, %s247
      %s249 = sphi 0, %s247
      %s250 = sphi 0, %s249
      %s264 = sphi 0, %s250
      %s268 = sphi 0, %s268
      %s270 = sphi 0, %s268
      %s271 = sphi 0, %s270
      %s285 = sphi 0, %s271
      %s289 = sphi 0, %s289
      %s291 = sphi 0, %s289
      %s292 = sphi 0, %s291
      %s306 = sphi 0, %s292
      %s312 = sphi 0, %s314
      %s315 = sphi 0, %s312
      %s316 = sphi 0, %s315
      %s332 = sphi 0, %s316
    $region4: #{tpu_custom_call.1} parent=1 // loop_header_branch
      %27 = sbr.rel (%p25) target = $region8
    $region5: #{tpu_custom_call.1} parent=1 // loop_body
      %s29 = ssub.s32 %s24, 1
      %s30 = ssub.s32 %s24, 2
      %s31 = sadd.s32 %s24, 1
      %s32 = ssub.s32 %s24, %s31
      %p33 = scmp.eq.s32.totalorder %s32, 0
      %s35 = sadd.s32 %s34, 1
      %s36 = scalar_select %p33, %s34, %s35
      %p39 = pneg %p33
      %p40 = scmp.eq.s32.totalorder %s24, 2
      %p41 = por %p39, %p40
      %p42 = scmp.ne.s32.totalorder %s34, %s37
      %p43 = scmp.eq.s32.totalorder %s24, 0
      %p44 = por %p42, %p43
      %p45 = scmp.ne.s32.totalorder %s34, %s37
      %p46 = scmp.eq.s32.totalorder %s29, 2
      %p47 = por %p45, %p46
      %p48 = scmp.ne.s32.totalorder %s37, %s38
      %p49 = scmp.eq.s32.totalorder %s29, 0
      %p50 = por %p48, %p49
      %p51 = scmp.ne.s32.totalorder %s37, %s38
      %p52 = scmp.eq.s32.totalorder %s30, 2
      %p53 = por %p51, %p52
      %p55 = scmp.ne.s32.totalorder %s38, %s54
      %p56 = scmp.eq.s32.totalorder %s30, 0
      %p57 = por %p55, %p56
      %s59 = sadd.s32 %s58, 1
      %p62 = scmp.eq.s32.totalorder %s24, 2
      %p63 = scmp.ne.s32.totalorder %s58, %s60
      %p64 = scmp.eq.s32.totalorder %s24, 0
      %p65 = por %p63, %p64
      %p66 = scmp.ne.s32.totalorder %s58, %s60
      %p67 = scmp.eq.s32.totalorder %s29, 2
      %p68 = por %p66, %p67
      %p69 = scmp.ne.s32.totalorder %s60, %s61
      %p70 = scmp.eq.s32.totalorder %s29, 0
      %p71 = por %p69, %p70
      %p72 = scmp.ne.s32.totalorder %s60, %s61
      %p73 = scmp.eq.s32.totalorder %s30, 2
      %p74 = por %p72, %p73
      %p76 = scmp.ne.s32.totalorder %s61, %s75
      %p77 = scmp.eq.s32.totalorder %s30, 0
      %p78 = por %p76, %p77
      %s80 = sadd.s32 %s79, 1
      %p83 = scmp.eq.s32.totalorder %s24, 2
      %p84 = scmp.ne.s32.totalorder %s79, %s81
      %p85 = scmp.eq.s32.totalorder %s24, 0
      %p86 = por %p84, %p85
      %p87 = scmp.ne.s32.totalorder %s79, %s81
      %p88 = scmp.eq.s32.totalorder %s29, 2
      %p89 = por %p87, %p88
      %p90 = scmp.ne.s32.totalorder %s81, %s82
      %p91 = scmp.eq.s32.totalorder %s29, 0
      %p92 = por %p90, %p91
      %p93 = scmp.ne.s32.totalorder %s81, %s82
      %p94 = scmp.eq.s32.totalorder %s30, 2
      %p95 = por %p93, %p94
      %p97 = scmp.ne.s32.totalorder %s82, %s96
      %p98 = scmp.eq.s32.totalorder %s30, 0
      %p99 = por %p97, %p98
      %s101 = sadd.s32 %s100, 1
      %p104 = scmp.eq.s32.totalorder %s24, 2
      %p105 = scmp.ne.s32.totalorder %s100, %s102
      %p106 = scmp.eq.s32.totalorder %s24, 0
      %p107 = por %p105, %p106
      %p108 = scmp.ne.s32.totalorder %s100, %s102
      %p109 = scmp.eq.s32.totalorder %s29, 2
      %p110 = por %p108, %p109
      %p111 = scmp.ne.s32.totalorder %s102, %s103
      %p112 = scmp.eq.s32.totalorder %s29, 0
      %p113 = por %p111, %p112
      %p114 = scmp.ne.s32.totalorder %s102, %s103
      %p115 = scmp.eq.s32.totalorder %s30, 2
      %p116 = por %p114, %p115
      %p118 = scmp.ne.s32.totalorder %s103, %s117
      %p119 = scmp.eq.s32.totalorder %s30, 0
      %p120 = por %p118, %p119
      %s122 = sadd.s32 %s121, 1
      %p125 = scmp.eq.s32.totalorder %s24, 2
      %p126 = scmp.ne.s32.totalorder %s121, %s123
      %p127 = scmp.eq.s32.totalorder %s24, 0
      %p128 = por %p126, %p127
      %p129 = scmp.ne.s32.totalorder %s121, %s123
      %p130 = scmp.eq.s32.totalorder %s29, 2
      %p131 = por %p129, %p130
      %p132 = scmp.ne.s32.totalorder %s123, %s124
      %p133 = scmp.eq.s32.totalorder %s29, 0
      %p134 = por %p132, %p133
      %p135 = scmp.ne.s32.totalorder %s123, %s124
      %p136 = scmp.eq.s32.totalorder %s30, 2
      %p137 = por %p135, %p136
      %p139 = scmp.ne.s32.totalorder %s124, %s138
      %p140 = scmp.eq.s32.totalorder %s30, 0
      %p141 = por %p139, %p140
      %s143 = sadd.s32 %s142, 1
      %p146 = scmp.eq.s32.totalorder %s24, 2
      %p147 = scmp.ne.s32.totalorder %s142, %s144
      %p148 = scmp.eq.s32.totalorder %s24, 0
      %p149 = por %p147, %p148
      %p150 = scmp.ne.s32.totalorder %s142, %s144
      %p151 = scmp.eq.s32.totalorder %s29, 2
      %p152 = por %p150, %p151
      %p153 = scmp.ne.s32.totalorder %s144, %s145
      %p154 = scmp.eq.s32.totalorder %s29, 0
      %p155 = por %p153, %p154
      %p156 = scmp.ne.s32.totalorder %s144, %s145
      %p157 = scmp.eq.s32.totalorder %s30, 2
      %p158 = por %p156, %p157
      %p160 = scmp.ne.s32.totalorder %s145, %s159
      %p161 = scmp.eq.s32.totalorder %s30, 0
      %p162 = por %p160, %p161
      %s164 = sadd.s32 %s163, 1
      %p167 = scmp.eq.s32.totalorder %s24, 2
      %p168 = scmp.ne.s32.totalorder %s163, %s165
      %p169 = scmp.eq.s32.totalorder %s24, 0
      %p170 = por %p168, %p169
      %p171 = scmp.ne.s32.totalorder %s163, %s165
      %p172 = scmp.eq.s32.totalorder %s29, 2
      %p173 = por %p171, %p172
      %p174 = scmp.ne.s32.totalorder %s165, %s166
      %p175 = scmp.eq.s32.totalorder %s29, 0
      %p176 = por %p174, %p175
      %p177 = scmp.ne.s32.totalorder %s165, %s166
      %p178 = scmp.eq.s32.totalorder %s30, 2
      %p179 = por %p177, %p178
      %p181 = scmp.ne.s32.totalorder %s166, %s180
      %p182 = scmp.eq.s32.totalorder %s30, 0
      %p183 = por %p181, %p182
      %s185 = sadd.s32 %s184, 1
      %p188 = scmp.eq.s32.totalorder %s24, 2
      %p189 = scmp.ne.s32.totalorder %s184, %s186
      %p190 = scmp.eq.s32.totalorder %s24, 0
      %p191 = por %p189, %p190
      %p192 = scmp.ne.s32.totalorder %s184, %s186
      %p193 = scmp.eq.s32.totalorder %s29, 2
      %p194 = por %p192, %p193
      %p195 = scmp.ne.s32.totalorder %s186, %s187
      %p196 = scmp.eq.s32.totalorder %s29, 0
      %p197 = por %p195, %p196
      %p198 = scmp.ne.s32.totalorder %s186, %s187
      %p199 = scmp.eq.s32.totalorder %s30, 2
      %p200 = por %p198, %p199
      %p202 = scmp.ne.s32.totalorder %s187, %s201
      %p203 = scmp.eq.s32.totalorder %s30, 0
      %p204 = por %p202, %p203
      %s206 = sadd.s32 %s205, 1
      %p209 = scmp.eq.s32.totalorder %s24, 2
      %p210 = scmp.ne.s32.totalorder %s205, %s207
      %p211 = scmp.eq.s32.totalorder %s24, 0
      %p212 = por %p210, %p211
      %p213 = scmp.ne.s32.totalorder %s205, %s207
      %p214 = scmp.eq.s32.totalorder %s29, 2
      %p215 = por %p213, %p214
      %p216 = scmp.ne.s32.totalorder %s207, %s208
      %p217 = scmp.eq.s32.totalorder %s29, 0
      %p218 = por %p216, %p217
      %p219 = scmp.ne.s32.totalorder %s207, %s208
      %p220 = scmp.eq.s32.totalorder %s30, 2
      %p221 = por %p219, %p220
      %p223 = scmp.ne.s32.totalorder %s208, %s222
      %p224 = scmp.eq.s32.totalorder %s30, 0
      %p225 = por %p223, %p224
      %s227 = sadd.s32 %s226, 1
      %p230 = scmp.eq.s32.totalorder %s24, 2
      %p231 = scmp.ne.s32.totalorder %s226, %s228
      %p232 = scmp.eq.s32.totalorder %s24, 0
      %p233 = por %p231, %p232
      %p234 = scmp.ne.s32.totalorder %s226, %s228
      %p235 = scmp.eq.s32.totalorder %s29, 2
      %p236 = por %p234, %p235
      %p237 = scmp.ne.s32.totalorder %s228, %s229
      %p238 = scmp.eq.s32.totalorder %s29, 0
      %p239 = por %p237, %p238
      %p240 = scmp.ne.s32.totalorder %s228, %s229
      %p241 = scmp.eq.s32.totalorder %s30, 2
      %p242 = por %p240, %p241
      %p244 = scmp.ne.s32.totalorder %s229, %s243
      %p245 = scmp.eq.s32.totalorder %s30, 0
      %p246 = por %p244, %p245
      %s248 = sadd.s32 %s247, 1
      %p251 = scmp.eq.s32.totalorder %s24, 2
      %p252 = scmp.ne.s32.totalorder %s247, %s249
      %p253 = scmp.eq.s32.totalorder %s24, 0
      %p254 = por %p252, %p253
      %p255 = scmp.ne.s32.totalorder %s247, %s249
      %p256 = scmp.eq.s32.totalorder %s29, 2
      %p257 = por %p255, %p256
      %p258 = scmp.ne.s32.totalorder %s249, %s250
      %p259 = scmp.eq.s32.totalorder %s29, 0
      %p260 = por %p258, %p259
      %p261 = scmp.ne.s32.totalorder %s249, %s250
      %p262 = scmp.eq.s32.totalorder %s30, 2
      %p263 = por %p261, %p262
      %p265 = scmp.ne.s32.totalorder %s250, %s264
      %p266 = scmp.eq.s32.totalorder %s30, 0
      %p267 = por %p265, %p266
      %s269 = sadd.s32 %s268, 1
      %p272 = scmp.eq.s32.totalorder %s24, 2
      %p273 = scmp.ne.s32.totalorder %s268, %s270
      %p274 = scmp.eq.s32.totalorder %s24, 0
      %p275 = por %p273, %p274
      %p276 = scmp.ne.s32.totalorder %s268, %s270
      %p277 = scmp.eq.s32.totalorder %s29, 2
      %p278 = por %p276, %p277
      %p279 = scmp.ne.s32.totalorder %s270, %s271
      %p280 = scmp.eq.s32.totalorder %s29, 0
      %p281 = por %p279, %p280
      %p282 = scmp.ne.s32.totalorder %s270, %s271
      %p283 = scmp.eq.s32.totalorder %s30, 2
      %p284 = por %p282, %p283
      %p286 = scmp.ne.s32.totalorder %s271, %s285
      %p287 = scmp.eq.s32.totalorder %s30, 0
      %p288 = por %p286, %p287
      %s290 = sadd.s32 %s289, 1
      %p293 = scmp.eq.s32.totalorder %s24, 2
      %p294 = scmp.ne.s32.totalorder %s289, %s291
      %p295 = scmp.eq.s32.totalorder %s24, 0
      %p296 = por %p294, %p295
      %p297 = scmp.ne.s32.totalorder %s289, %s291
      %p298 = scmp.eq.s32.totalorder %s29, 2
      %p299 = por %p297, %p298
      %p300 = scmp.ne.s32.totalorder %s291, %s292
      %p301 = scmp.eq.s32.totalorder %s29, 0
      %p302 = por %p300, %p301
      %p303 = scmp.ne.s32.totalorder %s291, %s292
      %p304 = scmp.eq.s32.totalorder %s30, 2
      %p305 = por %p303, %p304
      %p307 = scmp.ne.s32.totalorder %s292, %s306
      %p308 = scmp.eq.s32.totalorder %s30, 0
      %p309 = por %p307, %p308
      %s310 = ssub.s32 %s24, %s31
      %p311 = scmp.eq.s32.totalorder %s310, 0
      %s313 = sadd.s32 %s312, 1
      %s314 = scalar_select %p311, %s312, %s313
      %p317 = pneg %p311
      %p318 = scmp.eq.s32.totalorder %s24, 2
      %p319 = por %p317, %p318
      %p320 = scmp.ne.s32.totalorder %s312, %s315
      %p321 = scmp.eq.s32.totalorder %s24, 0
      %p322 = por %p320, %p321
      %p323 = scmp.ne.s32.totalorder %s312, %s315
      %p324 = scmp.eq.s32.totalorder %s29, 2
      %p325 = por %p323, %p324
      %p326 = scmp.ne.s32.totalorder %s315, %s316
      %p327 = scmp.eq.s32.totalorder %s29, 0
      %p328 = por %p326, %p327
      %p329 = scmp.ne.s32.totalorder %s315, %s316
      %p330 = scmp.eq.s32.totalorder %s30, 2
      %p331 = por %p329, %p330
      %p333 = scmp.ne.s32.totalorder %s316, %s332
      %p334 = scmp.eq.s32.totalorder %s30, 0
      %p335 = por %p333, %p334
      %p336 = scmp.le.s32.totalorder 1, %s24
      %p337 = scmp.lt.s32.totalorder %s24, 4
      %p338 = pnand %p336, %p337
      %p339 = pneg %p338
      // Predicated region
      $region9: #{tpu_custom_call.1} parent=5 // pred_check
        _
      $region10: #{tpu_custom_call.1} parent=5 // pred_check_branch
        %341 = sbr.rel (%p338) target = $region12
      $region11: #{tpu_custom_call.1} parent=5 // pred_region
        %s342 = ssub.s32 %s24, 1
        // Predicated region
        $region13: #{tpu_custom_call.1} parent=11 // pred_check
          %p343 = pneg %p71
        $region14: #{tpu_custom_call.1} parent=11 // pred_check_branch
          %345 = sbr.rel (%p343) target = $region16
        $region15: #{tpu_custom_call.1} parent=11 // pred_region
          _
        $region16: #{tpu_custom_call.1} parent=11 // pred_fallthru
          _
        // Predicated region
        $region17: #{tpu_custom_call.1} parent=11 // pred_check
          %p346 = pneg %p92
        $region18: #{tpu_custom_call.1} parent=11 // pred_check_branch
          %348 = sbr.rel (%p346) target = $region20
        $region19: #{tpu_custom_call.1} parent=11 // pred_region
          _
        $region20: #{tpu_custom_call.1} parent=11 // pred_fallthru
          _
        // Predicated region
        $region21: #{tpu_custom_call.1} parent=11 // pred_check
          %p349 = pneg %p113
        $region22: #{tpu_custom_call.1} parent=11 // pred_check_branch
          %351 = sbr.rel (%p349) target = $region24
        $region23: #{tpu_custom_call.1} parent=11 // pred_region
          _
        $region24: #{tpu_custom_call.1} parent=11 // pred_fallthru
          _
        // Predicated region
        $region25: #{tpu_custom_call.1} parent=11 // pred_check
          %p352 = pneg %p134
        $region26: #{tpu_custom_call.1} parent=11 // pred_check_branch
          %354 = sbr.rel (%p352) target = $region28
        $region27: #{tpu_custom_call.1} parent=11 // pred_region
          _
        $region28: #{tpu_custom_call.1} parent=11 // pred_fallthru
          _
        // Predicated region
        $region29: #{tpu_custom_call.1} parent=11 // pred_check
          %p355 = pneg %p155
        $region30: #{tpu_custom_call.1} parent=11 // pred_check_branch
          %357 = sbr.rel (%p355) target = $region32
        $region31: #{tpu_custom_call.1} parent=11 // pred_region
          _
        $region32: #{tpu_custom_call.1} parent=11 // pred_fallthru
          _
        // Predicated region
        $region33: #{tpu_custom_call.1} parent=11 // pred_check
          %p358 = pneg %p176
        $region34: #{tpu_custom_call.1} parent=11 // pred_check_branch
          %360 = sbr.rel (%p358) target = $region36
        $region35: #{tpu_custom_call.1} parent=11 // pred_region
          _
        $region36: #{tpu_custom_call.1} parent=11 // pred_fallthru
          _
        // Predicated region
        $region37: #{tpu_custom_call.1} parent=11 // pred_check
          %p361 = pneg %p197
        $region38: #{tpu_custom_call.1} parent=11 // pred_check_branch
          %363 = sbr.rel (%p361) target = $region40
        $region39: #{tpu_custom_call.1} parent=11 // pred_region
          _
        $region40: #{tpu_custom_call.1} parent=11 // pred_fallthru
          _
        // Predicated region
        $region41: #{tpu_custom_call.1} parent=11 // pred_check
          %p364 = pneg %p218
        $region42: #{tpu_custom_call.1} parent=11 // pred_check_branch
          %366 = sbr.rel (%p364) target = $region44
        $region43: #{tpu_custom_call.1} parent=11 // pred_region
          _
        $region44: #{tpu_custom_call.1} parent=11 // pred_fallthru
          _
        // Predicated region
        $region45: #{tpu_custom_call.1} parent=11 // pred_check
          %p367 = pneg %p239
        $region46: #{tpu_custom_call.1} parent=11 // pred_check_branch
          %369 = sbr.rel (%p367) target = $region48
        $region47: #{tpu_custom_call.1} parent=11 // pred_region
          _
        $region48: #{tpu_custom_call.1} parent=11 // pred_fallthru
          _
        // Predicated region
        $region49: #{tpu_custom_call.1} parent=11 // pred_check
          %p370 = pneg %p260
        $region50: #{tpu_custom_call.1} parent=11 // pred_check_branch
          %372 = sbr.rel (%p370) target = $region52
        $region51: #{tpu_custom_call.1} parent=11 // pred_region
          _
        $region52: #{tpu_custom_call.1} parent=11 // pred_fallthru
          _
        // Predicated region
        $region53: #{tpu_custom_call.1} parent=11 // pred_check
          %p373 = pneg %p281
        $region54: #{tpu_custom_call.1} parent=11 // pred_check_branch
          %375 = sbr.rel (%p373) target = $region56
        $region55: #{tpu_custom_call.1} parent=11 // pred_region
          _
        $region56: #{tpu_custom_call.1} parent=11 // pred_fallthru
          _
        // Predicated region
        $region57: #{tpu_custom_call.1} parent=11 // pred_check
          %p376 = pneg %p302
        $region58: #{tpu_custom_call.1} parent=11 // pred_check_branch
          %378 = sbr.rel (%p376) target = $region60
        $region59: #{tpu_custom_call.1} parent=11 // pred_region
          _
        $region60: #{tpu_custom_call.1} parent=11 // pred_fallthru
          _
      $region12: #{tpu_custom_call.1} parent=5 // pred_fallthru
        _
      %p379 = scmp.lt.s32.totalorder %s24, 3
      // Predicated region
      $region61: #{tpu_custom_call.1} parent=5 // pred_check
        %p380 = pneg %p379
      $region62: #{tpu_custom_call.1} parent=5 // pred_check_branch
        %382 = sbr.rel (%p380) target = $region64
      $region63: #{tpu_custom_call.1} parent=5 // pred_region
        // Predicated region
        $region65: #{tpu_custom_call.1} parent=63 // pred_check
          %p383 = pneg %p44
        $region66: #{tpu_custom_call.1} parent=63 // pred_check_branch
          %385 = sbr.rel (%p383) target = $region68
        $region67: #{tpu_custom_call.1} parent=63 // pred_region
          %s386 = smul.u32 16, %s24
          %s387 = ssub.s32 38, %s386
          %p388 = scmp.lt.s32.totalorder %s387, 16
          %s389 = scalar_select %p388, %s387, 16
          %s390 = smul.u32 128, %s389
          %p391 = scmp.lt.s32.totalorder %s386, 37
          %s392 = scalar_select %p391, %s386, 37
          %s393 = smul.addr %s392, 8
          %s394 = scalar_lea.vmem %s0, %s393
          %s395 = smul.u32 16, %s24
          %s396 = ssub.s32 38, %s395
          %p397 = scmp.lt.s32.totalorder %s396, 16
          %s398 = scalar_select %p397, %s396, 16
          %s399 = smul.u32 128, %s398
        $region68: #{tpu_custom_call.1} parent=63 // pred_fallthru
          _
      $region64: #{tpu_custom_call.1} parent=5 // pred_fallthru
        _
      %p400 = scmp.le.s32.totalorder 1, %s24
      %p401 = scmp.lt.s32.totalorder %s24, 4
      %p402 = pnand %p400, %p401
      %p403 = pneg %p402
      // Predicated region
      $region69: #{tpu_custom_call.1} parent=5 // pred_check
        _
      $region70: #{tpu_custom_call.1} parent=5 // pred_check_branch
        %405 = sbr.rel (%p402) target = $region72
      $region71: #{tpu_custom_call.1} parent=5 // pred_region
        %s406 = ssub.s32 %s24, 1
        %s407 = smul.u32 16, %s29
        %s408 = ssub.s32 38, %s407
        %p409 = scmp.lt.s32.totalorder %s408, 16
        %s410 = scalar_select %p409, %s408, 16
        %s411 = smul.u32 128, %s410
        %p412 = scmp.lt.s32.totalorder %s407, 37
        %s413 = scalar_select %p412, %s407, 37
        %s414 = smul.addr %s413, 8
        %s415 = scalar_lea.vmem %s0, %s414
        %p416 = pneg %p50
        %p417 = pneg %p47
        %p418 = pneg %p71
        %p419 = pneg %p68
        %p420 = pneg %p92
        %p421 = pneg %p89
        %p422 = pneg %p113
        %p423 = pneg %p110
        %p424 = pneg %p134
        %p425 = pneg %p131
        %p426 = pneg %p155
        %p427 = pneg %p152
        %p428 = pneg %p176
        %p429 = pneg %p173
        %p430 = pneg %p197
        %p431 = pneg %p194
        %p432 = pneg %p218
        %p433 = pneg %p215
        %p434 = pneg %p239
        %p435 = pneg %p236
        %p436 = pneg %p260
        %p437 = pneg %p257
        %p438 = pneg %p281
        %p439 = pneg %p278
        %p440 = pneg %p302
        %p441 = pneg %p299
        %p442 = pneg %p328
        %p443 = pneg %p325
        %s444 = sand.u32 %s315, 1
        %s445 = scalar_lea.sflag [#allocation4], %s444
        %s446 = sand.u32 %s315, 1
        %s447 = scalar_lea.vmem [#allocation3], %s446
        %s448 = smul.u32 16, %s29
        %s449 = ssub.s32 38, %s448
        %p450 = scmp.lt.s32.totalorder %s449, 16
        %s451 = scalar_select %p450, %s449, 16
        %s452 = smul.u32 128, %s451
        %p453 = scmp.lt.s32.totalorder %s448, 37
        %s454 = scalar_select %p453, %s448, 37
        %s455 = smul.addr %s454, 8
        %s456 = scalar_lea.vmem %s0, %s455
        %s457 = smul.u32 16, %s29
        %s458 = ssub.s32 38, %s457
        %p459 = scmp.lt.s32.totalorder %s458, 16
        %s460 = scalar_select %p459, %s458, 16
        %s461 = smul.u32 128, %s460
        %462 = vst [vmem:[%s447] sm:$0x1] 1.0
        %s463 = sand.u32 %s315, 1
        %s464 = scalar_lea.sflag [#allocation4], %s463
        %s465 = sand.u32 %s315, 1
        %s466 = scalar_lea.vmem [#allocation3], %s465
        // Predicated region
        $region73: #{tpu_custom_call.1} parent=71 // pred_check
          %p467 = pneg %p325
        $region74: #{tpu_custom_call.1} parent=71 // pred_check_branch
          %469 = sbr.rel (%p467) target = $region76
        $region75: #{tpu_custom_call.1} parent=71 // pred_region
          %s471 = ssub.s32 16, 16
          %472 = vsyncadd %s464, %s471
          %s473 = smul.addr %s29, 16
          %s474 = scalar_lea.hbm %s13, %s473
          %s476 = sshll.u32 %s466, 4
          %s477 = int_to_ptr.vmem [resolvable:$true] %s476
          %479 = dma.vmem_to_hbm [thread:$0]  %s477, 16, %s474, %s464
        $region76: #{tpu_custom_call.1} parent=71 // pred_fallthru
          _
      $region72: #{tpu_custom_call.1} parent=5 // pred_fallthru
        _
      %p480 = scmp.le.s32.totalorder 2, %s24
      // Predicated region
      $region77: #{tpu_custom_call.1} parent=5 // pred_check
        %p481 = pneg %p480
      $region78: #{tpu_custom_call.1} parent=5 // pred_check_branch
        %483 = sbr.rel (%p481) target = $region80
      $region79: #{tpu_custom_call.1} parent=5 // pred_region
        %s484 = ssub.s32 %s24, 2
        // Predicated region
        $region81: #{tpu_custom_call.1} parent=79 // pred_check
          %p485 = pneg %p331
        $region82: #{tpu_custom_call.1} parent=79 // pred_check_branch
          %487 = sbr.rel (%p485) target = $region84
        $region83: #{tpu_custom_call.1} parent=79 // pred_region
          %s488 = sand.u32 %s316, 1
          %s489 = scalar_lea.sflag [#allocation4], %s488
          %s490 = sand.u32 %s316, 1
          %s491 = scalar_lea.vmem [#allocation3], %s490
          %492 = dma.done %s489, 16
        $region84: #{tpu_custom_call.1} parent=79 // pred_fallthru
          _
      $region80: #{tpu_custom_call.1} parent=5 // pred_fallthru
        _
    $region6: #{tpu_custom_call.1} parent=1 // loop_footer
      %s28 = sadd.s32 1, %s24
    $region7: #{tpu_custom_call.1} parent=1 // loop_footer_branch
      %23 = sbr.rel target = $region3
    $region8: #{tpu_custom_call.1} parent=1 // loop_exit
      _
    %493 = vsyncpa [#allocation4], 1
    %s494 = scalar_lea.sflag [#allocation4], 1
    %495 = vsyncpa %s494, 1

</llo_original>
